<compile_context>
chip_gen: v7x
topology: tpu7x:2x2x1
jax: 0.10.0
libtpu: 0.0.40
codegen_flags: <defaults>
</compile_context>

<pallas_src>
import jax
import jax.numpy as jnp
from jax.experimental import pallas as pl
from jax.experimental.pallas import tpu as pltpu


def _make_kernel(tile_b, inv_count, eps2):
    def kernel(x1_ref, x2_ref, wo_t_ref, bo_ref, wo1_t_ref, bo1_ref,
               wp_t_ref, bp_ref, loss_ref, acc_ref):
        i = pl.program_id(0)

        @pl.when(i == 0)
        def _():
            acc_ref[0] = 0.0

        # Fused branches: rows [0, TB) are the x1 tile, rows [TB, 2*TB) the x2 tile.
        x = jnp.concatenate([x1_ref[...], x2_ref[...]], axis=0)

        bo = bo_ref[...]
        bo1 = bo1_ref[...]
        two_bo = 2.0 * bo          # hoisted out of SymReLU (single fused pass)
        two_bo1 = 2.0 * bo1

        z = jnp.dot(x, wo_t_ref[...], preferred_element_type=jnp.float32) + bo
        z = jnp.maximum(z, 0.0) - jnp.maximum(two_bo - z, 0.0)       # SymReLU
        z = jnp.dot(z, wo1_t_ref[...], preferred_element_type=jnp.float32) + bo1
        z = jnp.maximum(z, 0.0) - jnp.maximum(two_bo1 - z, 0.0)      # SymReLU
        # z[:TB] = zo (online branch), z[TB:] = zt (target branch).

        p = (jnp.dot(z, wp_t_ref[...], preferred_element_type=jnp.float32)
             + bp_ref[...])                                          # [p1; p2]

        # Pair p = [p1; p2] with [zt; zo]: half-length sublane rotation (XLU).
        z_sw = pltpu.roll(z, shift=tile_b, axis=0)

        # TODO(synk): D() applies stop_gradient to z; irrelevant for the
        # forward value computed here.
        pz = jnp.sum(p * z_sw, axis=-1, keepdims=True)
        pp = jnp.sum(p * p, axis=-1, keepdims=True)
        zz = jnp.sum(z_sw * z_sw, axis=-1, keepdims=True)
        # max(||p||,eps)*max(||z||,eps) == sqrt(max(pp,eps^2)*max(zz,eps^2)):
        # one EUP rsqrt instead of two sqrt + one divide.
        cos = pz * jax.lax.rsqrt(jnp.maximum(pp, eps2) * jnp.maximum(zz, eps2))
        acc_ref[0] = acc_ref[0] + jnp.sum(cos)

        @pl.when(i == pl.num_programs(0) - 1)
        def _():
            loss_ref[0, 0] = -acc_ref[0] * inv_count

    return kernel


def _round_up(n, m):
    return ((n + m - 1) // m) * m


def _pad2(x, rows, cols):
    r, c = x.shape
    return jnp.pad(x, ((0, rows - r), (0, cols - c)))


def simsiam_ml_forward(x1, x2, wo, bo, wo1, bo1, wp, bp, *, tile_b=8):
    """x1, x2: [B, p]. Torch-layout weights: wo [m, p], wo1/wp [m, m], biases [m]."""
    B, P = x1.shape
    M = wo.shape[0]
    LANE = 128

    p_pad = _round_up(P, LANE)
    m_pad = _round_up(M, LANE)
    n_tiles = pl.cdiv(B, tile_b)
    b_pad = n_tiles * tile_b

    f32 = jnp.float32
    # TODO(synk): for large m on v6e/v7x, cast the matmul operands to bf16
    # (keeping preferred_element_type=f32) to halve resident weight VMEM and
    # double MXU throughput; kept f32 here for exact parity with the reference.
    x1p = _pad2(x1.astype(f32), b_pad, p_pad)
    x2p = _pad2(x2.astype(f32), b_pad, p_pad)
    wo_t = _pad2(wo.T.astype(f32), p_pad, m_pad)
    wo1_t = _pad2(wo1.T.astype(f32), m_pad, m_pad)
    wp_t = _pad2(wp.T.astype(f32), m_pad, m_pad)
    bo_p = _pad2(bo[None, :].astype(f32), 1, m_pad)
    bo1_p = _pad2(bo1[None, :].astype(f32), 1, m_pad)
    bp_p = _pad2(bp[None, :].astype(f32), 1, m_pad)

    kernel = _make_kernel(tile_b, 1.0 / (2.0 * B), 1e-16)  # eps^2, eps = 1e-8

    const = lambda i: (0, 0)   # weights / biases / loss: resident across grid
    grid_spec = pltpu.PrefetchScalarGridSpec(
        num_scalar_prefetch=0,
        grid=(n_tiles,),
        in_specs=[
            pl.BlockSpec((tile_b, p_pad), lambda i: (i, 0)),   # x1 batch tile
            pl.BlockSpec((tile_b, p_pad), lambda i: (i, 0)),   # x2 batch tile
            pl.BlockSpec((p_pad, m_pad), const),               # Wo^T
            pl.BlockSpec((1, m_pad), const),                   # Wo.bias
            pl.BlockSpec((m_pad, m_pad), const),               # Wo_1^T
            pl.BlockSpec((1, m_pad), const),                   # Wo_1.bias
            pl.BlockSpec((m_pad, m_pad), const),               # Wp^T
            pl.BlockSpec((1, m_pad), const),                   # Wp.bias
        ],
        out_specs=pl.BlockSpec((1, 1), const,
                               memory_space=pltpu.MemorySpace.SMEM),
        scratch_shapes=[pltpu.SMEM((1,), jnp.float32)],        # cos-sum accumulator
    )

    flops = 2 * (2 * b_pad) * (p_pad * m_pad + 2 * m_pad * m_pad)
    bytes_accessed = 4 * (2 * b_pad * p_pad           # x1, x2
                          + p_pad * m_pad + 2 * m_pad * m_pad  # weights
                          + 3 * m_pad + 1)            # biases + loss
    cost = pl.CostEstimate(flops=flops,
                           transcendentals=2 * b_pad,  # one rsqrt per fused row
                           bytes_accessed=bytes_accessed)

    out = pl.pallas_call(
        kernel,
        out_shape=jax.ShapeDtypeStruct((1, 1), jnp.float32),
        grid_spec=grid_spec,
        compiler_params=pltpu.CompilerParams(
            # The SMEM accumulator is carried across the batch grid, so this
            # axis must be "arbitrary".  (On v7x, emitting per-tile partial
            # sums + reducing outside would allow "parallel" over 2 TCs.)
            dimension_semantics=("arbitrary",),
        ),
        cost_estimate=cost,
    )(x1p, x2p, wo_t, bo_p, wo1_t, bo1_p, wp_t, bp_p)
    return out[0, 0]


# ----------------------------- pure-JAX reference -----------------------------

def _srelu_ref(z, b):
    return jnp.maximum(z, 0.0) - jnp.maximum(2.0 * b - z, 0.0)


def _neg_cos_mean_ref(p, z, eps=1e-8):
    pn = jnp.sqrt(jnp.sum(p * p, axis=-1))
    zn = jnp.sqrt(jnp.sum(z * z, axis=-1))
    cos = jnp.sum(p * z, axis=-1) / (jnp.maximum(pn, eps) * jnp.maximum(zn, eps))
    return -jnp.mean(cos)


def _reference_forward(x1, x2, wo, bo, wo1, bo1, wp, bp):
    def enc(x):
        z = x @ wo.T + bo
        z = _srelu_ref(z, bo)
        z = z @ wo1.T + bo1
        z = _srelu_ref(z, bo1)
        return z

    zo, zt = enc(x1), enc(x2)
    p1, p2 = zo @ wp.T + bp, zt @ wp.T + bp
    return 0.5 * (_neg_cos_mean_ref(p1, zt) + _neg_cos_mean_ref(p2, zo))


if __name__ == "__main__":
    B, P, M = 16, 32, 32   # batch, input dim p, hidden dim m (toy sizes)

    key = jax.random.PRNGKey(0)
    kx1, kx2, kwo, kbo, kwo1, kbo1, kwp, kbp = jax.random.split(key, 8)

    x1 = jax.random.normal(kx1, (B, P), dtype=jnp.float32)
    x2 = jax.random.normal(kx2, (B, P), dtype=jnp.float32)

    # Deterministic parameter init (stands in for Wo_init / Wo1_init and the
    # default nn.Linear init of Wp / biases).
    wo = jax.random.normal(kwo, (M, P), dtype=jnp.float32) * 0.1    # Wo.weight
    bo = jax.random.normal(kbo, (M,), dtype=jnp.float32) * 0.1      # Wo.bias
    wo1 = jax.random.normal(kwo1, (M, M), dtype=jnp.float32) * 0.1  # Wo_1.weight
    bo1 = jax.random.normal(kbo1, (M,), dtype=jnp.float32) * 0.1    # Wo_1.bias
    wp = jax.random.normal(kwp, (M, M), dtype=jnp.float32) * 0.1    # Wp.weight
    bp = jax.random.normal(kbp, (M,), dtype=jnp.float32) * 0.1      # Wp.bias

    loss = simsiam_ml_forward(x1, x2, wo, bo, wo1, bo1, wp, bp, tile_b=8)
    loss = jax.block_until_ready(loss)

    ref = _reference_forward(x1, x2, wo, bo, wo1, bo1, wp, bp)
    assert jnp.allclose(loss, ref, atol=1e-5, rtol=1e-5), (loss, ref)

    print("KERNEL_OK")
</pallas_src>

<mosaic_0001>
module attributes {stable_mosaic.version = 11 : i64} {
  func.func @kernel(%arg0: i32, %arg1: memref<8x128xf32, #tpu.memory_space<vmem>>, %arg2: memref<8x128xf32, #tpu.memory_space<vmem>>, %arg3: memref<128x128xf32, #tpu.memory_space<vmem>>, %arg4: memref<1x128xf32, #tpu.memory_space<vmem>>, %arg5: memref<128x128xf32, #tpu.memory_space<vmem>>, %arg6: memref<1x128xf32, #tpu.memory_space<vmem>>, %arg7: memref<128x128xf32, #tpu.memory_space<vmem>>, %arg8: memref<1x128xf32, #tpu.memory_space<vmem>>, %arg9: memref<1x1xf32, #tpu.memory_space<smem>>, %arg10: memref<1xf32, #tpu.memory_space<smem>>) attributes {dimension_semantics = [#tpu.dimension_semantics<arbitrary>], iteration_bounds = array<i64: 2>, scalar_prefetch = 0 : i64, scratch_operands = 1 : i64, tpu.core_type = #tpu.core_type<tc>, window_params = [{transform_indices = @transform_0, window_bounds = array<i64: 8, 128>}, {transform_indices = @transform_1, window_bounds = array<i64: 8, 128>}, {pipeline_mode = #tpu.pipeline_mode<synchronous>, transform_indices = @transform_2, window_bounds = array<i64: 128, 128>}, {pipeline_mode = #tpu.pipeline_mode<synchronous>, transform_indices = @transform_3, window_bounds = array<i64: 1, 128>}, {pipeline_mode = #tpu.pipeline_mode<synchronous>, transform_indices = @transform_4, window_bounds = array<i64: 128, 128>}, {pipeline_mode = #tpu.pipeline_mode<synchronous>, transform_indices = @transform_5, window_bounds = array<i64: 1, 128>}, {pipeline_mode = #tpu.pipeline_mode<synchronous>, transform_indices = @transform_6, window_bounds = array<i64: 128, 128>}, {pipeline_mode = #tpu.pipeline_mode<synchronous>, transform_indices = @transform_7, window_bounds = array<i64: 1, 128>}, {transform_indices = @transform_8, window_bounds = array<i64: 1, 1>}]} {
    %c0_i32 = arith.constant 0 : i32
    %0 = arith.cmpi eq, %arg0, %c0_i32 : i32
    %1 = arith.extui %0 : i1 to i32
    %c0_i32_0 = arith.constant 0 : i32
    %2 = arith.cmpi ne, %1, %c0_i32_0 : i32
    scf.if %2 {
      %cst_33 = arith.constant 0.000000e+00 : f32
      %c0_34 = arith.constant 0 : index
      %66 = memref.load %arg10[%c0_34] : memref<1xf32, #tpu.memory_space<smem>>
      memref.store %cst_33, %arg10[%c0_34] : memref<1xf32, #tpu.memory_space<smem>>
    } else {
    }
    %c0 = arith.constant 0 : index
    %c0_1 = arith.constant 0 : index
    %3 = vector.load %arg1[%c0, %c0_1] : memref<8x128xf32, #tpu.memory_space<vmem>>, vector<8x128xf32>
    %c0_2 = arith.constant 0 : index
    %c0_3 = arith.constant 0 : index
    %4 = vector.load %arg2[%c0_2, %c0_3] : memref<8x128xf32, #tpu.memory_space<vmem>>, vector<8x128xf32>
    %5 = tpu.concatenate %3, %4 in 0 : vector<8x128xf32>, vector<8x128xf32> -> vector<16x128xf32>
    %c0_4 = arith.constant 0 : index
    %c0_5 = arith.constant 0 : index
    %6 = vector.load %arg4[%c0_4, %c0_5] : memref<1x128xf32, #tpu.memory_space<vmem>>, vector<1x128xf32>
    %c0_6 = arith.constant 0 : index
    %c0_7 = arith.constant 0 : index
    %7 = vector.load %arg6[%c0_6, %c0_7] : memref<1x128xf32, #tpu.memory_space<vmem>>, vector<1x128xf32>
    %cst = arith.constant 2.000000e+00 : f32
    %8 = vector.broadcast %cst : f32 to vector<1x128xf32>
    %9 = arith.mulf %8, %6 : vector<1x128xf32>
    %cst_8 = arith.constant 2.000000e+00 : f32
    %10 = vector.broadcast %cst_8 : f32 to vector<1x128xf32>
    %11 = arith.mulf %10, %7 : vector<1x128xf32>
    %c0_9 = arith.constant 0 : index
    %c0_10 = arith.constant 0 : index
    %12 = vector.load %arg3[%c0_9, %c0_10] : memref<128x128xf32, #tpu.memory_space<vmem>>, vector<128x128xf32>
    %cst_11 = arith.constant dense<0.000000e+00> : vector<16x128xf32>
    %13 = tpu.matmul %5, %12, %cst_11 {dimension_numbers = #tpu.dot_dimension_numbers<[1], [0], [0], [1], [0, 0, 1, 1], [], []>} : vector<16x128xf32>, vector<128x128xf32>, vector<16x128xf32> -> vector<16x128xf32>
    %14 = vector.broadcast %6 : vector<1x128xf32> to vector<16x128xf32>
    %15 = arith.addf %13, %14 : vector<16x128xf32>
    %cst_12 = arith.constant 0.000000e+00 : f32
    %16 = vector.broadcast %cst_12 : f32 to vector<16x128xf32>
    %17 = arith.maximumf %15, %16 : vector<16x128xf32>
    %18 = vector.broadcast %9 : vector<1x128xf32> to vector<16x128xf32>
    %19 = arith.subf %18, %15 : vector<16x128xf32>
    %cst_13 = arith.constant 0.000000e+00 : f32
    %20 = vector.broadcast %cst_13 : f32 to vector<16x128xf32>
    %21 = arith.maximumf %19, %20 : vector<16x128xf32>
    %22 = arith.subf %17, %21 : vector<16x128xf32>
    %c0_14 = arith.constant 0 : index
    %c0_15 = arith.constant 0 : index
    %23 = vector.load %arg5[%c0_14, %c0_15] : memref<128x128xf32, #tpu.memory_space<vmem>>, vector<128x128xf32>
    %cst_16 = arith.constant dense<0.000000e+00> : vector<16x128xf32>
    %24 = tpu.matmul %22, %23, %cst_16 {dimension_numbers = #tpu.dot_dimension_numbers<[1], [0], [0], [1], [0, 0, 1, 1], [], []>} : vector<16x128xf32>, vector<128x128xf32>, vector<16x128xf32> -> vector<16x128xf32>
    %25 = vector.broadcast %7 : vector<1x128xf32> to vector<16x128xf32>
    %26 = arith.addf %24, %25 : vector<16x128xf32>
    %cst_17 = arith.constant 0.000000e+00 : f32
    %27 = vector.broadcast %cst_17 : f32 to vector<16x128xf32>
    %28 = arith.maximumf %26, %27 : vector<16x128xf32>
    %29 = vector.broadcast %11 : vector<1x128xf32> to vector<16x128xf32>
    %30 = arith.subf %29, %26 : vector<16x128xf32>
    %cst_18 = arith.constant 0.000000e+00 : f32
    %31 = vector.broadcast %cst_18 : f32 to vector<16x128xf32>
    %32 = arith.maximumf %30, %31 : vector<16x128xf32>
    %33 = arith.subf %28, %32 : vector<16x128xf32>
    %c0_19 = arith.constant 0 : index
    %c0_20 = arith.constant 0 : index
    %34 = vector.load %arg7[%c0_19, %c0_20] : memref<128x128xf32, #tpu.memory_space<vmem>>, vector<128x128xf32>
    %cst_21 = arith.constant dense<0.000000e+00> : vector<16x128xf32>
    %35 = tpu.matmul %33, %34, %cst_21 {dimension_numbers = #tpu.dot_dimension_numbers<[1], [0], [0], [1], [0, 0, 1, 1], [], []>} : vector<16x128xf32>, vector<128x128xf32>, vector<16x128xf32> -> vector<16x128xf32>
    %c0_22 = arith.constant 0 : index
    %c0_23 = arith.constant 0 : index
    %36 = vector.load %arg8[%c0_22, %c0_23] : memref<1x128xf32, #tpu.memory_space<vmem>>, vector<1x128xf32>
    %37 = vector.broadcast %36 : vector<1x128xf32> to vector<16x128xf32>
    %38 = arith.addf %35, %37 : vector<16x128xf32>
    %c8_i32 = arith.constant 8 : i32
    %39 = tpu.dynamic_rotate %33 by %c8_i32 dim 0 : vector<16x128xf32>, i32 -> vector<16x128xf32>
    %40 = arith.mulf %38, %39 : vector<16x128xf32>
    %cst_24 = arith.constant dense<0.000000e+00> : vector<16xf32>
    %41 = vector.multi_reduction <add>, %40, %cst_24 [1] : vector<16x128xf32> to vector<16xf32>
    %42 = vector.shape_cast %41 : vector<16xf32> to vector<16x1xf32>
    %43 = arith.mulf %38, %38 : vector<16x128xf32>
    %cst_25 = arith.constant dense<0.000000e+00> : vector<16xf32>
    %44 = vector.multi_reduction <add>, %43, %cst_25 [1] : vector<16x128xf32> to vector<16xf32>
    %45 = vector.shape_cast %44 : vector<16xf32> to vector<16x1xf32>
    %46 = arith.mulf %39, %39 : vector<16x128xf32>
    %cst_26 = arith.constant dense<0.000000e+00> : vector<16xf32>
    %47 = vector.multi_reduction <add>, %46, %cst_26 [1] : vector<16x128xf32> to vector<16xf32>
    %48 = vector.shape_cast %47 : vector<16xf32> to vector<16x1xf32>
    %cst_27 = arith.constant 1.000000e-16 : f32
    %49 = vector.broadcast %cst_27 : f32 to vector<16x1xf32>
    %50 = arith.maximumf %45, %49 : vector<16x1xf32>
    %cst_28 = arith.constant 1.000000e-16 : f32
    %51 = vector.broadcast %cst_28 : f32 to vector<16x1xf32>
    %52 = arith.maximumf %48, %51 : vector<16x1xf32>
    %53 = arith.mulf %50, %52 : vector<16x1xf32>
    %54 = math.rsqrt %53 : vector<16x1xf32>
    %55 = arith.mulf %42, %54 : vector<16x1xf32>
    %c0_29 = arith.constant 0 : index
    %56 = memref.load %arg10[%c0_29] : memref<1xf32, #tpu.memory_space<smem>>
    %57 = vector.shape_cast %55 : vector<16x1xf32> to vector<1x16x1xf32>
    %cst_30 = arith.constant dense<0.000000e+00> : vector<1xf32>
    %58 = vector.multi_reduction <add>, %57, %cst_30 [1, 2] : vector<1x16x1xf32> to vector<1xf32>
    %59 = vector.shape_cast %58 : vector<1xf32> to vector<1x1x1xf32>
    %60 = vector.extract %59[0, 0, 0] : f32 from vector<1x1x1xf32>
    %61 = arith.addf %56, %60 : f32
    %c0_31 = arith.constant 0 : index
    %62 = memref.load %arg10[%c0_31] : memref<1xf32, #tpu.memory_space<smem>>
    memref.store %61, %arg10[%c0_31] : memref<1xf32, #tpu.memory_space<smem>>
    %c1_i32 = arith.constant 1 : i32
    %63 = arith.cmpi eq, %arg0, %c1_i32 : i32
    %64 = arith.extui %63 : i1 to i32
    %c0_i32_32 = arith.constant 0 : i32
    %65 = arith.cmpi ne, %64, %c0_i32_32 : i32
    scf.if %65 {
      %c0_33 = arith.constant 0 : index
      %66 = memref.load %arg10[%c0_33] : memref<1xf32, #tpu.memory_space<smem>>
      %cst_34 = arith.constant 0.000000e+00 : f32
      %67 = arith.subf %cst_34, %66 : f32
      %cst_35 = arith.constant 3.125000e-02 : f32
      %68 = arith.mulf %67, %cst_35 : f32
      %c0_36 = arith.constant 0 : index
      %c0_37 = arith.constant 0 : index
      %69 = memref.load %arg9[%c0_36, %c0_37] : memref<1x1xf32, #tpu.memory_space<smem>>
      memref.store %68, %arg9[%c0_36, %c0_37] : memref<1x1xf32, #tpu.memory_space<smem>>
    } else {
    }
    return
  }
  func.func @transform_0(%arg0: i32) -> (i32, i32) {
    %c0_i32 = arith.constant 0 : i32
    %c0_i32_0 = arith.constant 0 : i32
    return %arg0, %c0_i32 : i32, i32
  }
  func.func @transform_1(%arg0: i32) -> (i32, i32) {
    %c0_i32 = arith.constant 0 : i32
    %c0_i32_0 = arith.constant 0 : i32
    return %arg0, %c0_i32 : i32, i32
  }
  func.func @transform_2(%arg0: i32) -> (i32, i32) {
    %c0_i32 = arith.constant 0 : i32
    %c0_i32_0 = arith.constant 0 : i32
    %c0_i32_1 = arith.constant 0 : i32
    return %c0_i32, %c0_i32_0 : i32, i32
  }
  func.func @transform_3(%arg0: i32) -> (i32, i32) {
    %c0_i32 = arith.constant 0 : i32
    %c0_i32_0 = arith.constant 0 : i32
    %c0_i32_1 = arith.constant 0 : i32
    return %c0_i32, %c0_i32_0 : i32, i32
  }
  func.func @transform_4(%arg0: i32) -> (i32, i32) {
    %c0_i32 = arith.constant 0 : i32
    %c0_i32_0 = arith.constant 0 : i32
    %c0_i32_1 = arith.constant 0 : i32
    return %c0_i32, %c0_i32_0 : i32, i32
  }
  func.func @transform_5(%arg0: i32) -> (i32, i32) {
    %c0_i32 = arith.constant 0 : i32
    %c0_i32_0 = arith.constant 0 : i32
    %c0_i32_1 = arith.constant 0 : i32
    return %c0_i32, %c0_i32_0 : i32, i32
  }
  func.func @transform_6(%arg0: i32) -> (i32, i32) {
    %c0_i32 = arith.constant 0 : i32
    %c0_i32_0 = arith.constant 0 : i32
    %c0_i32_1 = arith.constant 0 : i32
    return %c0_i32, %c0_i32_0 : i32, i32
  }
  func.func @transform_7(%arg0: i32) -> (i32, i32) {
    %c0_i32 = arith.constant 0 : i32
    %c0_i32_0 = arith.constant 0 : i32
    %c0_i32_1 = arith.constant 0 : i32
    return %c0_i32, %c0_i32_0 : i32, i32
  }
  func.func @transform_8(%arg0: i32) -> (i32, i32) {
    %c0_i32 = arith.constant 0 : i32
    %c0_i32_0 = arith.constant 0 : i32
    %c0_i32_1 = arith.constant 0 : i32
    return %c0_i32, %c0_i32_0 : i32, i32
  }
}

</mosaic_0001>

<llo_original>
// kernel: tpu_custom_call.1
$region0: #{tpu_custom_call.1}
  #allocation0 [shape = 'u32[]', space=smem, size = 0x4, offset = 0x4, fixed_abs, tag = 'smem constant byte address 0x4 - core index']
  #allocation1 [shape = 'u32[144,128]{1,0:T(1,128)}', space=vmem, size = 0x12000, scoped, tag = 'internal scratch']
  #allocation2 [shape = 'f32[1]{0:T(128)}', space=smem, size = 0x200, scoped, tag = 'scratch operand']
  %s0 = inlined_call_operand.hbm [shape: f32[16,128], index: 0, kind: input, shape index: {}]
  %s1 = inlined_call_operand.hbm [shape: f32[16,128], index: 1, kind: input, shape index: {}]
  %s2 = inlined_call_operand.hbm [shape: f32[128,128], index: 2, kind: input, shape index: {}]
  %s3 = inlined_call_operand.vmem [shape: f32[1,128], index: 3, kind: input, shape index: {}]
  %s4 = inlined_call_operand.hbm [shape: f32[128,128], index: 4, kind: input, shape index: {}]
  %s5 = inlined_call_operand.vmem [shape: f32[1,128], index: 5, kind: input, shape index: {}]
  %s6 = inlined_call_operand.hbm [shape: f32[128,128], index: 6, kind: input, shape index: {}]
  %s7 = inlined_call_operand.vmem [shape: f32[1,128], index: 7, kind: input, shape index: {}]
  %s8 = inlined_call_operand.hbm [shape: f32[1,1], index: 8, kind: output, shape index: {}]
  %s9 = sld [smem:[#allocation0]]
  $region93: #{tpu_custom_call.1} parent=0
    _
  %s11 = ssub.s32 1, %s9
  %s12 = scalar_select 0, %s11, %s9
  $region1: #{tpu_custom_call.1} parent=0
    #allocation3 [shape = 'u8[8192]{0}', space=vmem, size = 0x2000, scoped, tag = 'input window, operand 0']
    #allocation4 [shape = 's32[2]{0}', space=sflag, size = 0x8, scoped, tag = 'scoped memory for tpu_custom_call.1']
    #allocation5 [shape = 's32[2]{0}', space=sflag, size = 0x8, scoped, tag = 'scoped memory for tpu_custom_call.1']
    #allocation6 [shape = 'u8[8192]{0}', space=vmem, size = 0x2000, scoped, tag = 'input window, operand 1']
    #allocation7 [shape = 's32[2]{0}', space=sflag, size = 0x8, scoped, tag = 'scoped memory for tpu_custom_call.1']
    #allocation8 [shape = 'u8[65536]{0}', space=vmem, size = 0x10000, scoped, tag = 'input window, operand 2, single buffered']
    #allocation9 [shape = 'u8[65536]{0}', space=vmem, size = 0x10000, scoped, tag = 'input window, operand 4, single buffered']
    #allocation10 [shape = 's32[1]{0}', space=sflag, size = 0x4, scoped, tag = 'scoped memory for tpu_custom_call.1']
    #allocation11 [shape = 'u8[65536]{0}', space=vmem, size = 0x10000, scoped, tag = 'input window, operand 6, single buffered']
    #allocation12 [shape = 'u8[512]{0}', space=smem, size = 0x200, scoped, tag = 'output window, operand 0, single buffered']
    %13 = vsyncpa [#allocation4], 0
    %s14 = scalar_lea.sflag [#allocation4], 1
    %15 = vsyncpa %s14, 0
    %16 = vsyncpa [#allocation7], 0
    %s17 = scalar_lea.sflag [#allocation7], 1
    %18 = vsyncpa %s17, 0
    %19 = vsyncpa [#allocation10], 0
    %20 = vsyncpa [#allocation5], 0
    loop: start=0, step=1, limit=4
    $region2: #{tpu_custom_call.1} parent=1 // loop_pre_header
      _
    $region3: #{tpu_custom_call.1} parent=1 // loop_header
      %s22 = sphi 0, %s26
      %p23 = scmp.ge.s32.totalorder %s22, 4
      %s32 = sphi 0, %s34
      %s35 = sphi 0, %s32
      %s36 = sphi 0, %s35
      %s52 = sphi 0, %s36
      %s58 = sphi 0, %s60
      %s61 = sphi 0, %s58
      %s62 = sphi 0, %s61
      %s78 = sphi 0, %s62
      %s82 = sphi 0, %s82
      %s84 = sphi 0, %s82
      %s85 = sphi 0, %s84
      %s99 = sphi 0, %s85
      %s103 = sphi 0, %s103
      %s105 = sphi 0, %s103
      %s106 = sphi 0, %s105
      %s120 = sphi 0, %s106
      %s124 = sphi 0, %s124
      %s126 = sphi 0, %s124
      %s127 = sphi 0, %s126
      %s141 = sphi 0, %s127
      %s145 = sphi 0, %s145
      %s147 = sphi 0, %s145
      %s148 = sphi 0, %s147
      %s162 = sphi 0, %s148
      %s166 = sphi 0, %s166
      %s168 = sphi 0, %s166
      %s169 = sphi 0, %s168
      %s183 = sphi 0, %s169
      %s187 = sphi 0, %s187
      %s189 = sphi 0, %s187
      %s190 = sphi 0, %s189
      %s204 = sphi 0, %s190
      %s208 = sphi 0, %s208
      %s210 = sphi 0, %s208
      %s211 = sphi 0, %s210
      %s225 = sphi 0, %s211
    $region4: #{tpu_custom_call.1} parent=1 // loop_header_branch
      %25 = sbr.rel (%p23) target = $region8
    $region5: #{tpu_custom_call.1} parent=1 // loop_body
      %s27 = ssub.s32 %s22, 1
      %s28 = ssub.s32 %s22, 2
      %s29 = sadd.s32 %s22, 1
      %s30 = ssub.s32 %s22, %s29
      %p31 = scmp.eq.s32.totalorder %s30, 0
      %s33 = sadd.s32 %s32, 1
      %s34 = scalar_select %p31, %s32, %s33
      %p37 = pneg %p31
      %p38 = scmp.eq.s32.totalorder %s22, 1
      %p39 = por %p37, %p38
      %p40 = scmp.ne.s32.totalorder %s32, %s35
      %p41 = scmp.eq.s32.totalorder %s22, 0
      %p42 = por %p40, %p41
      %p43 = scmp.ne.s32.totalorder %s32, %s35
      %p44 = scmp.eq.s32.totalorder %s27, 1
      %p45 = por %p43, %p44
      %p46 = scmp.ne.s32.totalorder %s35, %s36
      %p47 = scmp.eq.s32.totalorder %s27, 0
      %p48 = por %p46, %p47
      %p49 = scmp.ne.s32.totalorder %s35, %s36
      %p50 = scmp.eq.s32.totalorder %s28, 1
      %p51 = por %p49, %p50
      %p53 = scmp.ne.s32.totalorder %s36, %s52
      %p54 = scmp.eq.s32.totalorder %s28, 0
      %p55 = por %p53, %p54
      %s56 = ssub.s32 %s22, %s29
      %p57 = scmp.eq.s32.totalorder %s56, 0
      %s59 = sadd.s32 %s58, 1
      %s60 = scalar_select %p57, %s58, %s59
      %p63 = pneg %p57
      %p64 = scmp.eq.s32.totalorder %s22, 1
      %p65 = por %p63, %p64
      %p66 = scmp.ne.s32.totalorder %s58, %s61
      %p67 = scmp.eq.s32.totalorder %s22, 0
      %p68 = por %p66, %p67
      %p69 = scmp.ne.s32.totalorder %s58, %s61
      %p70 = scmp.eq.s32.totalorder %s27, 1
      %p71 = por %p69, %p70
      %p72 = scmp.ne.s32.totalorder %s61, %s62
      %p73 = scmp.eq.s32.totalorder %s27, 0
      %p74 = por %p72, %p73
      %p75 = scmp.ne.s32.totalorder %s61, %s62
      %p76 = scmp.eq.s32.totalorder %s28, 1
      %p77 = por %p75, %p76
      %p79 = scmp.ne.s32.totalorder %s62, %s78
      %p80 = scmp.eq.s32.totalorder %s28, 0
      %p81 = por %p79, %p80
      %s83 = sadd.s32 %s82, 1
      %p86 = scmp.eq.s32.totalorder %s22, 1
      %p87 = scmp.ne.s32.totalorder %s82, %s84
      %p88 = scmp.eq.s32.totalorder %s22, 0
      %p89 = por %p87, %p88
      %p90 = scmp.ne.s32.totalorder %s82, %s84
      %p91 = scmp.eq.s32.totalorder %s27, 1
      %p92 = por %p90, %p91
      %p93 = scmp.ne.s32.totalorder %s84, %s85
      %p94 = scmp.eq.s32.totalorder %s27, 0
      %p95 = por %p93, %p94
      %p96 = scmp.ne.s32.totalorder %s84, %s85
      %p97 = scmp.eq.s32.totalorder %s28, 1
      %p98 = por %p96, %p97
      %p100 = scmp.ne.s32.totalorder %s85, %s99
      %p101 = scmp.eq.s32.totalorder %s28, 0
      %p102 = por %p100, %p101
      %s104 = sadd.s32 %s103, 1
      %p107 = scmp.eq.s32.totalorder %s22, 1
      %p108 = scmp.ne.s32.totalorder %s103, %s105
      %p109 = scmp.eq.s32.totalorder %s22, 0
      %p110 = por %p108, %p109
      %p111 = scmp.ne.s32.totalorder %s103, %s105
      %p112 = scmp.eq.s32.totalorder %s27, 1
      %p113 = por %p111, %p112
      %p114 = scmp.ne.s32.totalorder %s105, %s106
      %p115 = scmp.eq.s32.totalorder %s27, 0
      %p116 = por %p114, %p115
      %p117 = scmp.ne.s32.totalorder %s105, %s106
      %p118 = scmp.eq.s32.totalorder %s28, 1
      %p119 = por %p117, %p118
      %p121 = scmp.ne.s32.totalorder %s106, %s120
      %p122 = scmp.eq.s32.totalorder %s28, 0
      %p123 = por %p121, %p122
      %s125 = sadd.s32 %s124, 1
      %p128 = scmp.eq.s32.totalorder %s22, 1
      %p129 = scmp.ne.s32.totalorder %s124, %s126
      %p130 = scmp.eq.s32.totalorder %s22, 0
      %p131 = por %p129, %p130
      %p132 = scmp.ne.s32.totalorder %s124, %s126
      %p133 = scmp.eq.s32.totalorder %s27, 1
      %p134 = por %p132, %p133
      %p135 = scmp.ne.s32.totalorder %s126, %s127
      %p136 = scmp.eq.s32.totalorder %s27, 0
      %p137 = por %p135, %p136
      %p138 = scmp.ne.s32.totalorder %s126, %s127
      %p139 = scmp.eq.s32.totalorder %s28, 1
      %p140 = por %p138, %p139
      %p142 = scmp.ne.s32.totalorder %s127, %s141
      %p143 = scmp.eq.s32.totalorder %s28, 0
      %p144 = por %p142, %p143
      %s146 = sadd.s32 %s145, 1
      %p149 = scmp.eq.s32.totalorder %s22, 1
      %p150 = scmp.ne.s32.totalorder %s145, %s147
      %p151 = scmp.eq.s32.totalorder %s22, 0
      %p152 = por %p150, %p151
      %p153 = scmp.ne.s32.totalorder %s145, %s147
      %p154 = scmp.eq.s32.totalorder %s27, 1
      %p155 = por %p153, %p154
      %p156 = scmp.ne.s32.totalorder %s147, %s148
      %p157 = scmp.eq.s32.totalorder %s27, 0
      %p158 = por %p156, %p157
      %p159 = scmp.ne.s32.totalorder %s147, %s148
      %p160 = scmp.eq.s32.totalorder %s28, 1
      %p161 = por %p159, %p160
      %p163 = scmp.ne.s32.totalorder %s148, %s162
      %p164 = scmp.eq.s32.totalorder %s28, 0
      %p165 = por %p163, %p164
      %s167 = sadd.s32 %s166, 1
      %p170 = scmp.eq.s32.totalorder %s22, 1
      %p171 = scmp.ne.s32.totalorder %s166, %s168
      %p172 = scmp.eq.s32.totalorder %s22, 0
      %p173 = por %p171, %p172
      %p174 = scmp.ne.s32.totalorder %s166, %s168
      %p175 = scmp.eq.s32.totalorder %s27, 1
      %p176 = por %p174, %p175
      %p177 = scmp.ne.s32.totalorder %s168, %s169
      %p178 = scmp.eq.s32.totalorder %s27, 0
      %p179 = por %p177, %p178
      %p180 = scmp.ne.s32.totalorder %s168, %s169
      %p181 = scmp.eq.s32.totalorder %s28, 1
      %p182 = por %p180, %p181
      %p184 = scmp.ne.s32.totalorder %s169, %s183
      %p185 = scmp.eq.s32.totalorder %s28, 0
      %p186 = por %p184, %p185
      %s188 = sadd.s32 %s187, 1
      %p191 = scmp.eq.s32.totalorder %s22, 1
      %p192 = scmp.ne.s32.totalorder %s187, %s189
      %p193 = scmp.eq.s32.totalorder %s22, 0
      %p194 = por %p192, %p193
      %p195 = scmp.ne.s32.totalorder %s187, %s189
      %p196 = scmp.eq.s32.totalorder %s27, 1
      %p197 = por %p195, %p196
      %p198 = scmp.ne.s32.totalorder %s189, %s190
      %p199 = scmp.eq.s32.totalorder %s27, 0
      %p200 = por %p198, %p199
      %p201 = scmp.ne.s32.totalorder %s189, %s190
      %p202 = scmp.eq.s32.totalorder %s28, 1
      %p203 = por %p201, %p202
      %p205 = scmp.ne.s32.totalorder %s190, %s204
      %p206 = scmp.eq.s32.totalorder %s28, 0
      %p207 = por %p205, %p206
      %s209 = sadd.s32 %s208, 1
      %p212 = scmp.eq.s32.totalorder %s22, 1
      %p213 = scmp.ne.s32.totalorder %s208, %s210
      %p214 = scmp.eq.s32.totalorder %s22, 0
      %p215 = por %p213, %p214
      %p216 = scmp.ne.s32.totalorder %s208, %s210
      %p217 = scmp.eq.s32.totalorder %s27, 1
      %p218 = por %p216, %p217
      %p219 = scmp.ne.s32.totalorder %s210, %s211
      %p220 = scmp.eq.s32.totalorder %s27, 0
      %p221 = por %p219, %p220
      %p222 = scmp.ne.s32.totalorder %s210, %s211
      %p223 = scmp.eq.s32.totalorder %s28, 1
      %p224 = por %p222, %p223
      %p226 = scmp.ne.s32.totalorder %s211, %s225
      %p227 = scmp.eq.s32.totalorder %s28, 0
      %p228 = por %p226, %p227
      %p229 = scmp.le.s32.totalorder 1, %s22
      %p230 = scmp.lt.s32.totalorder %s22, 3
      %p231 = pnand %p229, %p230
      %p232 = pneg %p231
      // Predicated region
      $region9: #{tpu_custom_call.1} parent=5 // pred_check
        _
      $region10: #{tpu_custom_call.1} parent=5 // pred_check_branch
        %234 = sbr.rel (%p231) target = $region12
      $region11: #{tpu_custom_call.1} parent=5 // pred_region
        %s235 = ssub.s32 %s22, 1
        // Predicated region
        $region13: #{tpu_custom_call.1} parent=11 // pred_check
          %p236 = pneg %p95
        $region14: #{tpu_custom_call.1} parent=11 // pred_check_branch
          %238 = sbr.rel (%p236) target = $region16
        $region15: #{tpu_custom_call.1} parent=11 // pred_region
          %s240 = ssub.s32 2048, 2048
          %241 = vsyncadd [#allocation7], %s240
          %s242 = sshll.u32 [#allocation8], 4
          %s243 = int_to_ptr.vmem [resolvable:$true] %s242
          %248 = dma.hbm_to_vmem [thread:$0]  %s2, 2048, %s243, [#allocation7], 128, 128, 8
        $region16: #{tpu_custom_call.1} parent=11 // pred_fallthru
          _
        // Predicated region
        $region17: #{tpu_custom_call.1} parent=11 // pred_check
          %p249 = pneg %p116
        $region18: #{tpu_custom_call.1} parent=11 // pred_check_branch
          %251 = sbr.rel (%p249) target = $region20
        $region19: #{tpu_custom_call.1} parent=11 // pred_region
          _
        $region20: #{tpu_custom_call.1} parent=11 // pred_fallthru
          _
        // Predicated region
        $region21: #{tpu_custom_call.1} parent=11 // pred_check
          %p252 = pneg %p137
        $region22: #{tpu_custom_call.1} parent=11 // pred_check_branch
          %254 = sbr.rel (%p252) target = $region24
        $region23: #{tpu_custom_call.1} parent=11 // pred_region
          %s256 = ssub.s32 2048, 2048
          %257 = vsyncadd [#allocation10], %s256
          %s258 = sshll.u32 [#allocation9], 4
          %s259 = int_to_ptr.vmem [resolvable:$true] %s258
          %264 = dma.hbm_to_vmem [thread:$0]  %s4, 2048, %s259, [#allocation10], 128, 128, 8
        $region24: #{tpu_custom_call.1} parent=11 // pred_fallthru
          _
        // Predicated region
        $region25: #{tpu_custom_call.1} parent=11 // pred_check
          %p265 = pneg %p158
        $region26: #{tpu_custom_call.1} parent=11 // pred_check_branch
          %267 = sbr.rel (%p265) target = $region28
        $region27: #{tpu_custom_call.1} parent=11 // pred_region
          _
        $region28: #{tpu_custom_call.1} parent=11 // pred_fallthru
          _
        // Predicated region
        $region29: #{tpu_custom_call.1} parent=11 // pred_check
          %p268 = pneg %p179
        $region30: #{tpu_custom_call.1} parent=11 // pred_check_branch
          %270 = sbr.rel (%p268) target = $region32
        $region31: #{tpu_custom_call.1} parent=11 // pred_region
          %s272 = ssub.s32 2048, 2048
          %273 = vsyncadd [#allocation10], %s272
          %s274 = sshll.u32 [#allocation11], 4
          %s275 = int_to_ptr.vmem [resolvable:$true] %s274
          %280 = dma.hbm_to_vmem [thread:$0]  %s6, 2048, %s275, [#allocation10], 128, 128, 8
        $region32: #{tpu_custom_call.1} parent=11 // pred_fallthru
          _
        // Predicated region
        $region33: #{tpu_custom_call.1} parent=11 // pred_check
          %p281 = pneg %p200
        $region34: #{tpu_custom_call.1} parent=11 // pred_check_branch
          %283 = sbr.rel (%p281) target = $region36
        $region35: #{tpu_custom_call.1} parent=11 // pred_region
          _
        $region36: #{tpu_custom_call.1} parent=11 // pred_fallthru
          _
      $region12: #{tpu_custom_call.1} parent=5 // pred_fallthru
        _
      %p284 = scmp.lt.s32.totalorder %s22, 2
      // Predicated region
      $region37: #{tpu_custom_call.1} parent=5 // pred_check
        %p285 = pneg %p284
      $region38: #{tpu_custom_call.1} parent=5 // pred_check_branch
        %287 = sbr.rel (%p285) target = $region40
      $region39: #{tpu_custom_call.1} parent=5 // pred_region
        // Predicated region
        $region41: #{tpu_custom_call.1} parent=39 // pred_check
          %p288 = pneg %p42
        $region42: #{tpu_custom_call.1} parent=39 // pred_check_branch
          %290 = sbr.rel (%p288) target = $region44
        $region43: #{tpu_custom_call.1} parent=39 // pred_region
          %s291 = sand.u32 %s32, 1
          %s292 = scalar_lea.sflag [#allocation4], %s291
          %s293 = sand.u32 %s32, 1
          %s294 = smul.addr %s293, 8
          %s295 = scalar_lea.vmem [#allocation3], %s294
          %s297 = ssub.s32 128, 128
          %298 = vsyncadd %s292, %s297
          %s299 = smul.addr %s22, 128
          %s300 = scalar_lea.hbm %s0, %s299
          %s302 = sshll.u32 %s295, 4
          %s303 = int_to_ptr.vmem [resolvable:$true] %s302
          %305 = dma.hbm_to_vmem [thread:$0]  %s300, 128, %s303, %s292
        $region44: #{tpu_custom_call.1} parent=39 // pred_fallthru
          _
        // Predicated region
        $region45: #{tpu_custom_call.1} parent=39 // pred_check
          %p306 = pneg %p68
        $region46: #{tpu_custom_call.1} parent=39 // pred_check_branch
          %308 = sbr.rel (%p306) target = $region48
        $region47: #{tpu_custom_call.1} parent=39 // pred_region
          %s309 = sand.u32 %s22, 1
          %s310 = scalar_lea.sflag [#allocation7], %s309
          %s311 = sand.u32 %s58, 1
          %s312 = smul.addr %s311, 8
          %s313 = scalar_lea.vmem [#allocation6], %s312
          %s315 = ssub.s32 128, 128
          %316 = vsyncadd %s310, %s315
          %s317 = smul.addr %s22, 128
          %s318 = scalar_lea.hbm %s1, %s317
          %s320 = sshll.u32 %s313, 4
          %s321 = int_to_ptr.vmem [resolvable:$true] %s320
          %323 = dma.hbm_to_vmem [thread:$0]  %s318, 128, %s321, %s310
        $region48: #{tpu_custom_call.1} parent=39 // pred_fallthru
          _
      $region40: #{tpu_custom_call.1} parent=5 // pred_fallthru
        _
      %p324 = scmp.le.s32.totalorder 1, %s22
      %p325 = scmp.lt.s32.totalorder %s22, 3
      %p326 = pnand %p324, %p325
      %p327 = pneg %p326
      // Predicated region
      $region49: #{tpu_custom_call.1} parent=5 // pred_check
        _
      $region50: #{tpu_custom_call.1} parent=5 // pred_check_branch
        %329 = sbr.rel (%p326) target = $region52
      $region51: #{tpu_custom_call.1} parent=5 // pred_region
        %s330 = ssub.s32 %s22, 1
        %s331 = sand.u32 %s35, 1
        %s332 = scalar_lea.sflag [#allocation4], %s331
        %s333 = sand.u32 %s35, 1
        %s334 = smul.addr %s333, 8
        %s335 = scalar_lea.vmem [#allocation3], %s334
        // Predicated region
        $region53: #{tpu_custom_call.1} parent=51 // pred_check
          %p336 = pneg %p48
        $region54: #{tpu_custom_call.1} parent=51 // pred_check_branch
          %338 = sbr.rel (%p336) target = $region56
        $region55: #{tpu_custom_call.1} parent=51 // pred_region
          %339 = dma.done %s332, 128
        $region56: #{tpu_custom_call.1} parent=51 // pred_fallthru
          _
        %s340 = sand.u32 %s27, 1
        %s341 = scalar_lea.sflag [#allocation7], %s340
        %s342 = sand.u32 %s61, 1
        %s343 = smul.addr %s342, 8
        %s344 = scalar_lea.vmem [#allocation6], %s343
        // Predicated region
        $region57: #{tpu_custom_call.1} parent=51 // pred_check
          %p345 = pneg %p74
        $region58: #{tpu_custom_call.1} parent=51 // pred_check_branch
          %347 = sbr.rel (%p345) target = $region60
        $region59: #{tpu_custom_call.1} parent=51 // pred_region
          %348 = dma.done %s341, 128
        $region60: #{tpu_custom_call.1} parent=51 // pred_fallthru
          _
        // Predicated region
        $region61: #{tpu_custom_call.1} parent=51 // pred_check
          %p349 = pneg %p95
        $region62: #{tpu_custom_call.1} parent=51 // pred_check_branch
          %351 = sbr.rel (%p349) target = $region64
        $region63: #{tpu_custom_call.1} parent=51 // pred_region
          %352 = dma.done [#allocation7], 2048
        $region64: #{tpu_custom_call.1} parent=51 // pred_fallthru
          _
        // Predicated region
        $region65: #{tpu_custom_call.1} parent=51 // pred_check
          %p353 = pneg %p137
        $region66: #{tpu_custom_call.1} parent=51 // pred_check_branch
          %355 = sbr.rel (%p353) target = $region68
        $region67: #{tpu_custom_call.1} parent=51 // pred_region
          %356 = dma.done [#allocation10], 2048
        $region68: #{tpu_custom_call.1} parent=51 // pred_fallthru
          _
        // Predicated region
        $region69: #{tpu_custom_call.1} parent=51 // pred_check
          %p357 = pneg %p179
        $region70: #{tpu_custom_call.1} parent=51 // pred_check_branch
          %359 = sbr.rel (%p357) target = $region72
        $region71: #{tpu_custom_call.1} parent=51 // pred_region
          %360 = dma.done [#allocation10], 2048
        $region72: #{tpu_custom_call.1} parent=51 // pred_fallthru
          _
        %s361 = sand.u32 %s35, 1
        %s362 = scalar_lea.sflag [#allocation4], %s361
        %s363 = sand.u32 %s35, 1
        %s364 = smul.addr %s363, 8
        %s365 = scalar_lea.vmem [#allocation3], %s364
        %p366 = pneg %p48
        %p367 = pneg %p45
        %s368 = sand.u32 %s27, 1
        %s369 = scalar_lea.sflag [#allocation7], %s368
        %s370 = sand.u32 %s61, 1
        %s371 = smul.addr %s370, 8
        %s372 = scalar_lea.vmem [#allocation6], %s371
        %p373 = pneg %p74
        %p374 = pneg %p71
        %p375 = pneg %p95
        %p376 = pneg %p92
        %p377 = pneg %p116
        %p378 = pneg %p113
        %p379 = pneg %p137
        %p380 = pneg %p134
        %p381 = pneg %p158
        %p382 = pneg %p155
        %p383 = pneg %p179
        %p384 = pneg %p176
        %p385 = pneg %p200
        %p386 = pneg %p197
        %p387 = pneg %p221
        %p388 = pneg %p218
        %p389 = scmp.eq.s32.totalorder %s27, 0
        // Predicated region
        $region73: #{tpu_custom_call.1} parent=51 // pred_check
          %p390 = pneg %p389
        $region74: #{tpu_custom_call.1} parent=51 // pred_check_branch
          %392 = sbr.rel (%p390) target = $region76
        $region75: #{tpu_custom_call.1} parent=51 // pred_region
          %s393 = scalar_lea.smem [#allocation2], 0
          %394 = sst [smem:[%s393]] 0.0
        $region76: #{tpu_custom_call.1} parent=51 // pred_fallthru
          _
        %v395 = vld [vmem:[%s335] sm:$0xff]
        %v396 = vld [vmem:[%s344] sm:$0xff]
        %v397 = vld [vmem:[%s3] sm:$0x1]
        %v398 = vld [vmem:[%s5] sm:$0x1]
        %v399 = vmul.f32 %v397, 2.0
        %v400 = vmul.f32 %v398, 2.0
        %v401 = vld [vmem:[#allocation8] sm:$0xff]
        %v402 = vld [vmem:[#allocation8 + $0x8] sm:$0xff]
        %v403 = vld [vmem:[#allocation8 + $0x10] sm:$0xff]
        %v404 = vld [vmem:[#allocation8 + $0x18] sm:$0xff]
        %v405 = vld [vmem:[#allocation8 + $0x20] sm:$0xff]
        %v406 = vld [vmem:[#allocation8 + $0x28] sm:$0xff]
        %v407 = vld [vmem:[#allocation8 + $0x30] sm:$0xff]
        %v408 = vld [vmem:[#allocation8 + $0x38] sm:$0xff]
        %v409 = vld [vmem:[#allocation8 + $0x40] sm:$0xff]
        %v410 = vld [vmem:[#allocation8 + $0x48] sm:$0xff]
        %v411 = vld [vmem:[#allocation8 + $0x50] sm:$0xff]
        %v412 = vld [vmem:[#allocation8 + $0x58] sm:$0xff]
        %v413 = vld [vmem:[#allocation8 + $0x60] sm:$0xff]
        %v414 = vld [vmem:[#allocation8 + $0x68] sm:$0xff]
        %v415 = vld [vmem:[#allocation8 + $0x70] sm:$0xff]
        %v416 = vld [vmem:[#allocation8 + $0x78] sm:$0xff]
        %v418 = vlaneseq
        %v419 = vshrl.u32 %v418, 7
        %v420 = vsub.s32 0, %v419
        %v421 = vrot.slane %v397, %v420
        %423 = vmatprep.subr.mxu0 0.0
        %424 = vmatpush1.msra.mxu0 %v401
        %425 = vmatprep.subr.mxu0 0.0
        %426 = vmatpush1.msra.mxu0 %v402
        %427 = vmatprep.subr.mxu0 0.0
        %428 = vmatpush1.msra.mxu0 %v403
        %429 = vmatprep.subr.mxu0 0.0
        %430 = vmatpush1.msra.mxu0 %v404
        %431 = vmatprep.subr.mxu0 0.0
        %432 = vmatpush1.msra.mxu0 %v405
        %433 = vmatprep.subr.mxu0 0.0
        %434 = vmatpush1.msra.mxu0 %v406
        %435 = vmatprep.subr.mxu0 0.0
        %436 = vmatpush1.msra.mxu0 %v407
        %437 = vmatprep.subr.mxu0 0.0
        %438 = vmatpush1.msra.mxu0 %v408
        %439 = vmatprep.subr.mxu0 0.0
        %440 = vmatpush1.msra.mxu0 %v409
        %441 = vmatprep.subr.mxu0 0.0
        %442 = vmatpush1.msra.mxu0 %v410
        %443 = vmatprep.subr.mxu0 0.0
        %444 = vmatpush1.msra.mxu0 %v411
        %445 = vmatprep.subr.mxu0 0.0
        %446 = vmatpush1.msra.mxu0 %v412
        %447 = vmatprep.subr.mxu0 0.0
        %448 = vmatpush1.msra.mxu0 %v413
        %449 = vmatprep.subr.mxu0 0.0
        %450 = vmatpush1.msra.mxu0 %v414
        %451 = vmatprep.subr.mxu0 0.0
        %452 = vmatpush1.msra.mxu0 %v415
        %453 = vmatprep.subr.mxu0 0.0
        %454 = vmatpush1.msra.mxu0 %v416
        %455 = vmatprep.subr.mxu0 0.0
        %456 = vmatpush1.msra.mxu0 0.0
        %457 = vmatprep.subr.mxu0 0.0
        %458 = vmatpush1.msra.mxu0 0.0
        %459 = vmatprep.subr.mxu0 0.0
        %460 = vmatpush1.msra.mxu0 0.0
        %461 = vmatprep.subr.mxu0 0.0
        %462 = vmatpush1.msra.mxu0 0.0
        %463 = vmatprep.subr.mxu0 0.0
        %464 = vmatpush1.msra.mxu0 0.0
        %465 = vmatprep.subr.mxu0 0.0
        %466 = vmatpush1.msra.mxu0 0.0
        %467 = vmatprep.subr.mxu0 0.0
        %468 = vmatpush1.msra.mxu0 0.0
        %469 = vmatprep.subr.mxu0 0.0
        %470 = vmatpush1.msra.mxu0 0.0
        %471 = vmatprep.subr.mxu0 0.0
        %472 = vmatpush1.msra.mxu0 0.0
        %473 = vmatprep.subr.mxu0 0.0
        %474 = vmatpush1.msra.mxu0 0.0
        %475 = vmatprep.subr.mxu0 0.0
        %476 = vmatpush1.msra.mxu0 0.0
        %477 = vmatprep.subr.mxu0 0.0
        %478 = vmatpush1.msra.mxu0 0.0
        %479 = vmatprep.subr.mxu0 0.0
        %480 = vmatpush1.msra.mxu0 0.0
        %481 = vmatprep.subr.mxu0 0.0
        %482 = vmatpush1.msra.mxu0 0.0
        %483 = vmatprep.subr.mxu0 0.0
        %484 = vmatpush1.msra.mxu0 0.0
        %485 = vmatprep.subr.mxu0 0.0
        %486 = vmatpush1.msra.mxu0 0.0
        %487 = vmatprep.mubr.f32.mxu0 0.0
        %488 = vmatmul.mubr.f32.gmra.mrb[0].mxu0 %v395
        %v489 = vpop.f32.mrb[0].mxu0
        %v490 = vadd.f32 %v421, %v489
        %v491 = vpop.f32.mrb[0].mxu0
        %492 = vmatprep.mubr.f32.mxu0 0.0
        %493 = vmatmul.mubr.f32.gmra.mrb[0].mxu0 %v396
        %v494 = vpop.f32.mrb[0].mxu0
        %v495 = vadd.f32 %v421, %v494
        %v496 = vpop.f32.mrb[0].mxu0
        %497 = vdwg.mxu0
        %v498 = vmax.f32 %v490, 0.0
        %v499 = vmax.f32 %v495, 0.0
        %v501 = vlaneseq
        %v502 = vshrl.u32 %v501, 7
        %v503 = vsub.s32 0, %v502
        %v504 = vrot.slane %v399, %v503
        %v506 = vsub.f32 %v504, %v490
        %v507 = vsub.f32 %v504, %v495
        %v508 = vmax.f32 %v506, 0.0
        %v509 = vmax.f32 %v507, 0.0
        %v510 = vsub.f32 %v498, %v508
        %v511 = vsub.f32 %v499, %v509
        %v512 = vld [vmem:[#allocation9] sm:$0xff]
        %v513 = vld [vmem:[#allocation9 + $0x8] sm:$0xff]
        %v514 = vld [vmem:[#allocation9 + $0x10] sm:$0xff]
        %v515 = vld [vmem:[#allocation9 + $0x18] sm:$0xff]
        %v516 = vld [vmem:[#allocation9 + $0x20] sm:$0xff]
        %v517 = vld [vmem:[#allocation9 + $0x28] sm:$0xff]
        %v518 = vld [vmem:[#allocation9 + $0x30] sm:$0xff]
        %v519 = vld [vmem:[#allocation9 + $0x38] sm:$0xff]
        %v520 = vld [vmem:[#allocation9 + $0x40] sm:$0xff]
        %v521 = vld [vmem:[#allocation9 + $0x48] sm:$0xff]
        %v522 = vld [vmem:[#allocation9 + $0x50] sm:$0xff]
        %v523 = vld [vmem:[#allocation9 + $0x58] sm:$0xff]
        %v524 = vld [vmem:[#allocation9 + $0x60] sm:$0xff]
        %v525 = vld [vmem:[#allocation9 + $0x68] sm:$0xff]
        %v526 = vld [vmem:[#allocation9 + $0x70] sm:$0xff]
        %v527 = vld [vmem:[#allocation9 + $0x78] sm:$0xff]
        %v529 = vlaneseq
        %v530 = vshrl.u32 %v529, 7
        %v531 = vsub.s32 0, %v530
        %v532 = vrot.slane %v398, %v531
        %534 = vmatprep.subr.mxu0 0.0
        %535 = vmatpush1.msra.mxu0 %v512
        %536 = vmatprep.subr.mxu0 0.0
        %537 = vmatpush1.msra.mxu0 %v513
        %538 = vmatprep.subr.mxu0 0.0
        %539 = vmatpush1.msra.mxu0 %v514
        %540 = vmatprep.subr.mxu0 0.0
        %541 = vmatpush1.msra.mxu0 %v515
        %542 = vmatprep.subr.mxu0 0.0
        %543 = vmatpush1.msra.mxu0 %v516
        %544 = vmatprep.subr.mxu0 0.0
        %545 = vmatpush1.msra.mxu0 %v517
        %546 = vmatprep.subr.mxu0 0.0
        %547 = vmatpush1.msra.mxu0 %v518
        %548 = vmatprep.subr.mxu0 0.0
        %549 = vmatpush1.msra.mxu0 %v519
        %550 = vmatprep.subr.mxu0 0.0
        %551 = vmatpush1.msra.mxu0 %v520
        %552 = vmatprep.subr.mxu0 0.0
        %553 = vmatpush1.msra.mxu0 %v521
        %554 = vmatprep.subr.mxu0 0.0
        %555 = vmatpush1.msra.mxu0 %v522
        %556 = vmatprep.subr.mxu0 0.0
        %557 = vmatpush1.msra.mxu0 %v523
        %558 = vmatprep.subr.mxu0 0.0
        %559 = vmatpush1.msra.mxu0 %v524
        %560 = vmatprep.subr.mxu0 0.0
        %561 = vmatpush1.msra.mxu0 %v525
        %562 = vmatprep.subr.mxu0 0.0
        %563 = vmatpush1.msra.mxu0 %v526
        %564 = vmatprep.subr.mxu0 0.0
        %565 = vmatpush1.msra.mxu0 %v527
        %566 = vmatprep.subr.mxu0 0.0
        %567 = vmatpush1.msra.mxu0 0.0
        %568 = vmatprep.subr.mxu0 0.0
        %569 = vmatpush1.msra.mxu0 0.0
        %570 = vmatprep.subr.mxu0 0.0
        %571 = vmatpush1.msra.mxu0 0.0
        %572 = vmatprep.subr.mxu0 0.0
        %573 = vmatpush1.msra.mxu0 0.0
        %574 = vmatprep.subr.mxu0 0.0
        %575 = vmatpush1.msra.mxu0 0.0
        %576 = vmatprep.subr.mxu0 0.0
        %577 = vmatpush1.msra.mxu0 0.0
        %578 = vmatprep.subr.mxu0 0.0
        %579 = vmatpush1.msra.mxu0 0.0
        %580 = vmatprep.subr.mxu0 0.0
        %581 = vmatpush1.msra.mxu0 0.0
        %582 = vmatprep.subr.mxu0 0.0
        %583 = vmatpush1.msra.mxu0 0.0
        %584 = vmatprep.subr.mxu0 0.0
        %585 = vmatpush1.msra.mxu0 0.0
        %586 = vmatprep.subr.mxu0 0.0
        %587 = vmatpush1.msra.mxu0 0.0
        %588 = vmatprep.subr.mxu0 0.0
        %589 = vmatpush1.msra.mxu0 0.0
        %590 = vmatprep.subr.mxu0 0.0
        %591 = vmatpush1.msra.mxu0 0.0
        %592 = vmatprep.subr.mxu0 0.0
        %593 = vmatpush1.msra.mxu0 0.0
        %594 = vmatprep.subr.mxu0 0.0
        %595 = vmatpush1.msra.mxu0 0.0
        %596 = vmatprep.subr.mxu0 0.0
        %597 = vmatpush1.msra.mxu0 0.0
        %598 = vmatprep.mubr.f32.mxu0 0.0
        %599 = vmatmul.mubr.f32.gmra.mrb[0].mxu0 %v510
        %v600 = vpop.f32.mrb[0].mxu0
        %v601 = vadd.f32 %v532, %v600
        %v602 = vpop.f32.mrb[0].mxu0
        %603 = vmatprep.mubr.f32.mxu0 0.0
        %604 = vmatmul.mubr.f32.gmra.mrb[0].mxu0 %v511
        %v605 = vpop.f32.mrb[0].mxu0
        %v606 = vadd.f32 %v532, %v605
        %v607 = vpop.f32.mrb[0].mxu0
        %608 = vdwg.mxu0
        %v609 = vmax.f32 %v601, 0.0
        %v610 = vmax.f32 %v606, 0.0
        %v612 = vlaneseq
        %v613 = vshrl.u32 %v612, 7
        %v614 = vsub.s32 0, %v613
        %v615 = vrot.slane %v400, %v614
        %v617 = vsub.f32 %v615, %v601
        %v618 = vsub.f32 %v615, %v606
        %v619 = vmax.f32 %v617, 0.0
        %v620 = vmax.f32 %v618, 0.0
        %v621 = vsub.f32 %v609, %v619
        %v622 = vsub.f32 %v610, %v620
        %v623 = vld [vmem:[#allocation11] sm:$0xff]
        %v624 = vld [vmem:[#allocation11 + $0x8] sm:$0xff]
        %v625 = vld [vmem:[#allocation11 + $0x10] sm:$0xff]
        %v626 = vld [vmem:[#allocation11 + $0x18] sm:$0xff]
        %v627 = vld [vmem:[#allocation11 + $0x20] sm:$0xff]
        %v628 = vld [vmem:[#allocation11 + $0x28] sm:$0xff]
        %v629 = vld [vmem:[#allocation11 + $0x30] sm:$0xff]
        %v630 = vld [vmem:[#allocation11 + $0x38] sm:$0xff]
        %v631 = vld [vmem:[#allocation11 + $0x40] sm:$0xff]
        %v632 = vld [vmem:[#allocation11 + $0x48] sm:$0xff]
        %v633 = vld [vmem:[#allocation11 + $0x50] sm:$0xff]
        %v634 = vld [vmem:[#allocation11 + $0x58] sm:$0xff]
        %v635 = vld [vmem:[#allocation11 + $0x60] sm:$0xff]
        %v636 = vld [vmem:[#allocation11 + $0x68] sm:$0xff]
        %v637 = vld [vmem:[#allocation11 + $0x70] sm:$0xff]
        %v638 = vld [vmem:[#allocation11 + $0x78] sm:$0xff]
        %v639 = vld [vmem:[%s7] sm:$0x1]
        %v641 = vlaneseq
        %v642 = vshrl.u32 %v641, 7
        %v643 = vsub.s32 0, %v642
        %v644 = vrot.slane %v639, %v643
        %646 = vmatprep.subr.mxu0 0.0
        %647 = vmatpush1.msra.mxu0 %v623
        %648 = vmatprep.subr.mxu0 0.0
        %649 = vmatpush1.msra.mxu0 %v624
        %650 = vmatprep.subr.mxu0 0.0
        %651 = vmatpush1.msra.mxu0 %v625
        %652 = vmatprep.subr.mxu0 0.0
        %653 = vmatpush1.msra.mxu0 %v626
        %654 = vmatprep.subr.mxu0 0.0
        %655 = vmatpush1.msra.mxu0 %v627
        %656 = vmatprep.subr.mxu0 0.0
        %657 = vmatpush1.msra.mxu0 %v628
        %658 = vmatprep.subr.mxu0 0.0
        %659 = vmatpush1.msra.mxu0 %v629
        %660 = vmatprep.subr.mxu0 0.0
        %661 = vmatpush1.msra.mxu0 %v630
        %662 = vmatprep.subr.mxu0 0.0
        %663 = vmatpush1.msra.mxu0 %v631
        %664 = vmatprep.subr.mxu0 0.0
        %665 = vmatpush1.msra.mxu0 %v632
        %666 = vmatprep.subr.mxu0 0.0
        %667 = vmatpush1.msra.mxu0 %v633
        %668 = vmatprep.subr.mxu0 0.0
        %669 = vmatpush1.msra.mxu0 %v634
        %670 = vmatprep.subr.mxu0 0.0
        %671 = vmatpush1.msra.mxu0 %v635
        %672 = vmatprep.subr.mxu0 0.0
        %673 = vmatpush1.msra.mxu0 %v636
        %674 = vmatprep.subr.mxu0 0.0
        %675 = vmatpush1.msra.mxu0 %v637
        %676 = vmatprep.subr.mxu0 0.0
        %677 = vmatpush1.msra.mxu0 %v638
        %678 = vmatprep.subr.mxu0 0.0
        %679 = vmatpush1.msra.mxu0 0.0
        %680 = vmatprep.subr.mxu0 0.0
        %681 = vmatpush1.msra.mxu0 0.0
        %682 = vmatprep.subr.mxu0 0.0
        %683 = vmatpush1.msra.mxu0 0.0
        %684 = vmatprep.subr.mxu0 0.0
        %685 = vmatpush1.msra.mxu0 0.0
        %686 = vmatprep.subr.mxu0 0.0
        %687 = vmatpush1.msra.mxu0 0.0
        %688 = vmatprep.subr.mxu0 0.0
        %689 = vmatpush1.msra.mxu0 0.0
        %690 = vmatprep.subr.mxu0 0.0
        %691 = vmatpush1.msra.mxu0 0.0
        %692 = vmatprep.subr.mxu0 0.0
        %693 = vmatpush1.msra.mxu0 0.0
        %694 = vmatprep.subr.mxu0 0.0
        %695 = vmatpush1.msra.mxu0 0.0
        %696 = vmatprep.subr.mxu0 0.0
        %697 = vmatpush1.msra.mxu0 0.0
        %698 = vmatprep.subr.mxu0 0.0
        %699 = vmatpush1.msra.mxu0 0.0
        %700 = vmatprep.subr.mxu0 0.0
        %701 = vmatpush1.msra.mxu0 0.0
        %702 = vmatprep.subr.mxu0 0.0
        %703 = vmatpush1.msra.mxu0 0.0
        %704 = vmatprep.subr.mxu0 0.0
        %705 = vmatpush1.msra.mxu0 0.0
        %706 = vmatprep.subr.mxu0 0.0
        %707 = vmatpush1.msra.mxu0 0.0
        %708 = vmatprep.subr.mxu0 0.0
        %709 = vmatpush1.msra.mxu0 0.0
        %710 = vmatprep.mubr.f32.mxu0 0.0
        %711 = vmatmul.mubr.f32.gmra.mrb[0].mxu0 %v621
        %v712 = vpop.f32.mrb[0].mxu0
        %v713 = vadd.f32 %v644, %v712
        %v714 = vpop.f32.mrb[0].mxu0
        %715 = vmatprep.mubr.f32.mxu0 0.0
        %716 = vmatmul.mubr.f32.gmra.mrb[0].mxu0 %v622
        %v717 = vpop.f32.mrb[0].mxu0
        %v718 = vadd.f32 %v644, %v717
        %v719 = vpop.f32.mrb[0].mxu0
        %720 = vdwg.mxu0
        %v721 = vmul.f32 %v713, %v622
        %v722 = vmul.f32 %v718, %v621
        %723 = vadd.xlane.f32.xlu0 %v721
        %v724 = vpop.xlane.xlu0 %723
        %725 = vadd.xlane.f32.xlu0 %v722
        %v726 = vpop.xlane.xlu0 %725
        %v727 = vmul.f32 %v713, %v713
        %v728 = vmul.f32 %v718, %v718
        %729 = vadd.xlane.f32.xlu0 %v727
        %v730 = vpop.xlane.xlu0 %729
        %731 = vadd.xlane.f32.xlu0 %v728
        %v732 = vpop.xlane.xlu0 %731
        %v733 = vmul.f32 %v622, %v622
        %v734 = vmul.f32 %v621, %v621
        %735 = vadd.xlane.f32.xlu0 %v733
        %v736 = vpop.xlane.xlu0 %735
        %737 = vadd.xlane.f32.xlu0 %v734
        %v738 = vpop.xlane.xlu0 %737
        %v739 = vmax.f32 %v730, 1e-16
        %v740 = vmax.f32 %v732, 1e-16
        %v741 = vmax.f32 %v736, 1e-16
        %v742 = vmax.f32 %v738, 1e-16
        %v743 = vmul.f32 %v739, %v741
        %v744 = vmul.f32 %v740, %v742
        %v745 = vrsqrt.pop %v743
        %v746 = vrsqrt.pop %v744
        %v747 = vmul.f32 %v724, %v745
        %v748 = vmul.f32 %v726, %v746
        %s749 = sld [smem:[#allocation2]]
        %vm750 = vcmask 7168
        %v751 = vsel %vm750, %v747, 0.0
        %v752 = vsel %vm750, %v748, 0.0
        %v753 = vadd.f32 %v751, %v752
        %754 = vadd.xlane.f32.xlu0 %v753
        %v755 = vpop.xlane.xlu0 %754
        %v756 = vrot.slane %v755, 4
        %v757 = vadd.f32 %v755, %v756
        %v758 = vrot.slane %v757, 2
        %v759 = vadd.f32 %v757, %v758
        %v760 = vrot.slane %v759, 1
        %v761 = vadd.f32 %v759, %v760
        %s762 = vtos %v761
        %s763 = sadd.f32 %s749, %s762
        %s764 = scalar_lea.smem [#allocation2], 0
        %765 = sst [smem:[%s764]] %s763
        %p766 = scmp.eq.s32.totalorder %s27, 1
        // Predicated region
        $region77: #{tpu_custom_call.1} parent=51 // pred_check
          %p767 = pneg %p766
        $region78: #{tpu_custom_call.1} parent=51 // pred_check_branch
          %769 = sbr.rel (%p767) target = $region80
        $region79: #{tpu_custom_call.1} parent=51 // pred_region
          %s770 = sld [smem:[#allocation2]]
          %s771 = ssub.f32 0.0, %s770
          %s772 = smul.f32 %s771, 0.03125
          %s773 = scalar_lea.smem [#allocation12], 0
          %774 = sst [smem:[%s773]] %s772
        $region80: #{tpu_custom_call.1} parent=51 // pred_fallthru
          _
        // Predicated region
        $region81: #{tpu_custom_call.1} parent=51 // pred_check
          %p775 = pneg %p218
        $region82: #{tpu_custom_call.1} parent=51 // pred_check_branch
          %777 = sbr.rel (%p775) target = $region84
        $region83: #{tpu_custom_call.1} parent=51 // pred_region
          %s779 = ssub.s32 16, 16
          %780 = vsyncadd [#allocation5], %s779
          %783 = dma.smem_to_hbm [#allocation12], 16, %s8, [#allocation5]
        $region84: #{tpu_custom_call.1} parent=51 // pred_fallthru
          _
        // Predicated region
        $region85: #{tpu_custom_call.1} parent=51 // pred_check
          %p784 = pneg %p218
        $region86: #{tpu_custom_call.1} parent=51 // pred_check_branch
          %786 = sbr.rel (%p784) target = $region88
        $region87: #{tpu_custom_call.1} parent=51 // pred_region
          %787 = dma.done [#allocation5], 16
        $region88: #{tpu_custom_call.1} parent=51 // pred_fallthru
          _
        %788 = sfence
      $region52: #{tpu_custom_call.1} parent=5 // pred_fallthru
        _
      %p789 = scmp.le.s32.totalorder 2, %s22
      // Predicated region
      $region89: #{tpu_custom_call.1} parent=5 // pred_check
        %p790 = pneg %p789
      $region90: #{tpu_custom_call.1} parent=5 // pred_check_branch
        %792 = sbr.rel (%p790) target = $region92
      $region91: #{tpu_custom_call.1} parent=5 // pred_region
        %s793 = ssub.s32 %s22, 2
      $region92: #{tpu_custom_call.1} parent=5 // pred_fallthru
        _
    $region6: #{tpu_custom_call.1} parent=1 // loop_footer
      %s26 = sadd.s32 1, %s22
    $region7: #{tpu_custom_call.1} parent=1 // loop_footer_branch
      %21 = sbr.rel target = $region3
    $region8: #{tpu_custom_call.1} parent=1 // loop_exit
      _
    %794 = vsyncpa [#allocation4], 1
    %s795 = scalar_lea.sflag [#allocation4], 1
    %796 = vsyncpa %s795, 1
    %797 = vsyncpa [#allocation7], 1
    %s798 = scalar_lea.sflag [#allocation7], 1
    %799 = vsyncpa %s798, 1
    %800 = vsyncpa [#allocation10], 1
    %801 = vsyncpa [#allocation5], 1
    %s802 = scalar_lea.sflag [#allocation5], 1
    %803 = vsyncpa %s802, 1

</llo_original>
